<compile_context>
chip_gen: v7x
topology: tpu7x:2x2x1
jax: 0.10.0
libtpu: 0.0.40
codegen_flags: <defaults>
</compile_context>

<pallas_src>
import functools
import math

import jax
import jax.numpy as jnp
from jax import lax
from jax.experimental import pallas as pl
from jax.experimental.pallas import tpu as pltpu


def _cdiv(a, b):
    return -(-a // b)


def _round_up(x, m):
    return _cdiv(x, m) * m


def _pick_tile(dim, cap, align):
    """Tile size (<= cap) for a lane-ish dim; prefer exact divisors, else pad."""
    if dim <= cap:
        return dim
    t = cap
    while t >= align:
        if dim % t == 0:
            return t
        t -= align
    return cap


# ----------------------------------------------------------------------------
# Kernel 1: packed complex linear   Y' = X' @ W' + b'
#   X' = [xr | xi] (M, 2K) bf16, W' = [[wr^T, wi^T], [-wi^T, wr^T]] (2K, 2N) bf16,
#   b' = [br | bi] (1, 2N) f32  ->  Y' = [yr | yi] (M, 2N).
# Grid = (M tiles, N tiles, K tiles); accumulate in an f32 VMEM scratch, write the
# output block once at the last K step (in out_dtype).
# ----------------------------------------------------------------------------
def _packed_linear_kernel(x_ref, w_ref, b_ref, o_ref, acc_ref):
    k = pl.program_id(2)

    @pl.when(k == 0)
    def _():
        acc_ref[...] = jnp.broadcast_to(b_ref[...], acc_ref.shape)

    acc_ref[...] += jnp.dot(x_ref[...], w_ref[...],
                            preferred_element_type=jnp.float32)

    @pl.when(k == pl.num_programs(2) - 1)
    def _():
        o_ref[...] = acc_ref[...].astype(o_ref.dtype)


def _packed_matmul(xp, wp, bp, *, out_dtype=jnp.bfloat16,
                   tm_max=512, tn_max=512, tk_max=512):
    """xp: (M, K2) bf16, wp: (K2, N2) bf16, bp: (1, N2) f32 -> (M, N2) out_dtype."""
    M, K2 = xp.shape
    _, N2 = wp.shape

    # Minimise M-padding waste (e.g. M=520 uses tm=264, not 512->1024).
    tm = _round_up(_cdiv(M, _cdiv(M, tm_max)), 8)
    Mp = _round_up(M, tm)
    tk = _pick_tile(K2, tk_max, 256)
    Kp = _round_up(K2, tk)
    tn = _pick_tile(N2, tn_max, 256)
    Np = _round_up(N2, tn)

    if Mp > M or Kp > K2:
        xp = jnp.pad(xp, ((0, Mp - M), (0, Kp - K2)))
    if Kp > K2 or Np > N2:
        wp = jnp.pad(wp, ((0, Kp - K2), (0, Np - N2)))
    if Np > N2:
        bp = jnp.pad(bp, ((0, 0), (0, Np - N2)))

    grid = (Mp // tm, Np // tn, Kp // tk)
    out = pl.pallas_call(
        _packed_linear_kernel,
        out_shape=jax.ShapeDtypeStruct((Mp, Np), out_dtype),
        grid_spec=pltpu.PrefetchScalarGridSpec(
            num_scalar_prefetch=0,
            grid=grid,
            in_specs=[
                pl.BlockSpec((tm, tk), lambda i, j, k: (i, k)),
                pl.BlockSpec((tk, tn), lambda i, j, k: (k, j)),
                pl.BlockSpec((1, tn), lambda i, j, k: (0, j)),
            ],
            out_specs=pl.BlockSpec((tm, tn), lambda i, j, k: (i, j)),
            scratch_shapes=[pltpu.VMEM((tm, tn), jnp.float32)],
        ),
        compiler_params=pltpu.CompilerParams(
            dimension_semantics=("parallel", "parallel", "arbitrary"),
            vmem_limit_bytes=48 * 1024 * 1024),
    )(xp, wp, bp)
    if Mp > M or Np > N2:
        out = out[:M, :N2]
    return out


def _pack_weight(wr, wi):
    """torch-layout (N, K) real/imag -> packed (2K, 2N) bf16."""
    wt_r, wt_i = wr.T, wi.T
    return jnp.concatenate(
        [jnp.concatenate([wt_r, wt_i], axis=1),
         jnp.concatenate([-wt_i, wt_r], axis=1)], axis=0).astype(jnp.bfloat16)


def _pack_bias(br, bi):
    return jnp.concatenate([br, bi]).reshape(1, -1).astype(jnp.float32)


def packed_complex_linear(xr, xi, wp, bp, *, out_dtype=jnp.bfloat16):
    """cLinear with precomputed packed weight/bias.
    xr/xi: (..., K).  wp: (2K, 2N) bf16.  bp: (1, 2N) f32.
    Returns (yr, yi) of shape (..., N) in out_dtype."""
    lead = xr.shape[:-1]
    K = xr.shape[-1]
    N = wp.shape[1] // 2
    M = math.prod(lead) if lead else 1

    xp = jnp.concatenate([xr.reshape(M, K), xi.reshape(M, K)],
                         axis=-1).astype(jnp.bfloat16)            # (M, 2K)
    yp = _packed_matmul(xp, wp, bp, out_dtype=out_dtype)
    yr = yp[:, :N].reshape(lead + (N,))
    yi = yp[:, N:].reshape(lead + (N,))
    return yr, yi


# ----------------------------------------------------------------------------
# Kernel 2: complex scaled-dot-product attention, one grid step per
# (batch, head, Lq tile).
#   scores  S = Q @ K^T / sqrt(D)                  (complex, no conjugation)
#   weights P = softmax(Re S) + i*softmax(Im S)    (complexNN split-softmax)
#   output  O = P @ V                              (complex)
# Packed operands (built once in the wrapper, bf16):
#   qp = [qr | qi]                       (Lq, 2D)
#   kp = [[kr^T, ki^T], [-ki^T, kr^T]]   (2D, 2Lk)  -> qp @ kp = [Re S | Im S]
#   vp = [[vr, vi], [-vi, vr]]           (2Lk, 2D)  -> Pr@vp[:Lk] + Pi@vp[Lk:] = [Or|Oi]
# ----------------------------------------------------------------------------
def _csdpa_kernel(qp_ref, kp_ref, vp_ref, op_ref, *, scale, lk, causal):
    qp = qp_ref[...] * scale                                        # (tq, 2D) bf16
    s = jnp.dot(qp, kp_ref[...], preferred_element_type=jnp.float32)  # (tq, 2Lk)
    sr = s[:, :lk]
    si = s[:, lk:]

    if causal:
        tq = sr.shape[0]
        q0 = pl.program_id(2) * tq
        row = q0 + lax.broadcasted_iota(jnp.int32, (tq, lk), 0)
        col = lax.broadcasted_iota(jnp.int32, (tq, lk), 1)
        keep = col <= row
        neg = jnp.float32(-1e30)
        sr = jnp.where(keep, sr, neg)
        si = jnp.where(keep, si, neg)

    def _softmax(x):
        m = jnp.max(x, axis=-1, keepdims=True)
        e = jnp.exp(x - m)
        return e * pl.reciprocal(jnp.sum(e, axis=-1, keepdims=True), approx=True)

    pr = _softmax(sr).astype(vp_ref.dtype)                          # (tq, Lk)
    pi = _softmax(si).astype(vp_ref.dtype)
    o = jnp.dot(pr, vp_ref[pl.ds(0, lk), :], preferred_element_type=jnp.float32)
    o = o + jnp.dot(pi, vp_ref[pl.ds(lk, lk), :], preferred_element_type=jnp.float32)
    op_ref[...] = o.astype(op_ref.dtype)                            # (tq, 2D)


def complex_sdpa(qr, qi, kr, ki, vr, vi, *, is_causal=False, tq_max=256):
    """q*: (B, H, Lq, D), k*/v*: (B, H, Lk, D) -> (or, oi) (B, H, Lq, D) bf16."""
    B, H, Lq, D = qr.shape
    Lk = kr.shape[2]
    scale = 1.0 / math.sqrt(D)
    bf = jnp.bfloat16

    qp = jnp.concatenate([qr, qi], axis=-1).astype(bf)               # (B,H,Lq,2D)
    krt = jnp.swapaxes(kr, -1, -2).astype(bf)                        # (B,H,D,Lk)
    kit = jnp.swapaxes(ki, -1, -2).astype(bf)
    kp = jnp.concatenate(
        [jnp.concatenate([krt, kit], axis=-1),
         jnp.concatenate([-kit, krt], axis=-1)], axis=-2)            # (B,H,2D,2Lk)
    vp = jnp.concatenate(
        [jnp.concatenate([vr, vi], axis=-1),
         jnp.concatenate([-vi, vr], axis=-1)], axis=-2).astype(bf)   # (B,H,2Lk,2D)

    tq = _round_up(_cdiv(Lq, _cdiv(Lq, tq_max)), 8)
    Lqp = _round_up(Lq, tq)
    if Lqp > Lq:
        qp = jnp.pad(qp, ((0, 0), (0, 0), (0, Lqp - Lq), (0, 0)))
    nq = Lqp // tq

    kernel = functools.partial(_csdpa_kernel, scale=scale, lk=Lk,
                               causal=bool(is_causal))
    # TODO(synk): for very long Lk this should go flash-style (online softmax over
    # Lk tiles); the Lq tiling already bounds VMEM to O(tq * Lk).
    out = pl.pallas_call(
        kernel,
        out_shape=jax.ShapeDtypeStruct((B, H, Lqp, 2 * D), jnp.bfloat16),
        grid_spec=pltpu.PrefetchScalarGridSpec(
            num_scalar_prefetch=0,
            grid=(B, H, nq),
            in_specs=[
                pl.BlockSpec((None, None, tq, 2 * D), lambda b, h, q: (b, h, q, 0)),
                pl.BlockSpec((None, None, 2 * D, 2 * Lk), lambda b, h, q: (b, h, 0, 0)),
                pl.BlockSpec((None, None, 2 * Lk, 2 * D), lambda b, h, q: (b, h, 0, 0)),
            ],
            out_specs=pl.BlockSpec((None, None, tq, 2 * D),
                                   lambda b, h, q: (b, h, q, 0)),
        ),
        compiler_params=pltpu.CompilerParams(
            dimension_semantics=("parallel", "parallel", "parallel"),
            vmem_limit_bytes=48 * 1024 * 1024),
    )(qp, kp, vp)
    out = out[:, :, :Lq]
    return out[..., :D], out[..., D:]


# ----------------------------------------------------------------------------
# Module
# ----------------------------------------------------------------------------
def _split_complex(x):
    if jnp.iscomplexobj(x):
        return jnp.real(x).astype(jnp.float32), jnp.imag(x).astype(jnp.float32)
    x = x.astype(jnp.float32)
    return x, jnp.zeros_like(x)


class CMultiHeadAttention:
    """JAX/Pallas port of complexNN cMultiHeadAttention (forward pass only)."""

    def __init__(self, E_q, E_k, E_v, E_total, nheads, dropout=0.0, bias=True, *, key):
        assert E_total % nheads == 0, "Embedding dim is not divisible by nheads"
        self.nheads = nheads
        self.E_head = E_total // nheads
        self.E_total = E_total
        self.dropout = dropout
        self.bias = bias
        self._qkv_same_embed_dim = (E_q == E_k) and (E_q == E_v)

        def xavier(k, fan_out, fan_in):
            a = math.sqrt(6.0 / (fan_in + fan_out))
            return jax.random.uniform(k, (fan_out, fan_in), jnp.float32, -a, a)

        ks = list(jax.random.split(key, 16))
        if self._qkv_same_embed_dim:
            self.pw_r = xavier(ks[0], 3 * E_total, E_q)
            self.pw_i = xavier(ks[1], 3 * E_total, E_q)
            if bias:
                self.pb_r = xavier(ks[2], 1, 3 * E_total)[0]
                self.pb_i = xavier(ks[3], 1, 3 * E_total)[0]
            else:
                self.pb_r = jnp.zeros((3 * E_total,), jnp.float32)
                self.pb_i = jnp.zeros((3 * E_total,), jnp.float32)
            # Precomputed packed operands (fused and per-projection variants).
            self.packed_wp = _pack_weight(self.pw_r, self.pw_i)
            self.packed_bp = _pack_bias(self.pb_r, self.pb_i)
            qw_r, kw_r, vw_r = jnp.split(self.pw_r, 3, axis=0)
            qw_i, kw_i, vw_i = jnp.split(self.pw_i, 3, axis=0)
            qb_r, kb_r, vb_r = jnp.split(self.pb_r, 3)
            qb_i, kb_i, vb_i = jnp.split(self.pb_i, 3)
            self.q_wp, self.q_bp = _pack_weight(qw_r, qw_i), _pack_bias(qb_r, qb_i)
            self.k_wp, self.k_bp = _pack_weight(kw_r, kw_i), _pack_bias(kb_r, kb_i)
            self.v_wp, self.v_bp = _pack_weight(vw_r, vw_i), _pack_bias(vb_r, vb_i)
        else:
            self.qw_r = xavier(ks[0], E_total, E_q)
            self.qw_i = xavier(ks[1], E_total, E_q)
            self.kw_r = xavier(ks[2], E_total, E_k)
            self.kw_i = xavier(ks[3], E_total, E_k)
            self.vw_r = xavier(ks[4], E_total, E_v)
            self.vw_i = xavier(ks[5], E_total, E_v)
            if bias:
                self.qb_r = xavier(ks[6], 1, E_total)[0]
                self.qb_i = xavier(ks[7], 1, E_total)[0]
                self.kb_r = xavier(ks[8], 1, E_total)[0]
                self.kb_i = xavier(ks[9], 1, E_total)[0]
                self.vb_r = xavier(ks[10], 1, E_total)[0]
                self.vb_i = xavier(ks[11], 1, E_total)[0]
            else:
                z = jnp.zeros((E_total,), jnp.float32)
                self.qb_r = self.qb_i = z
                self.kb_r = self.kb_i = z
                self.vb_r = self.vb_i = z
            self.q_wp, self.q_bp = (_pack_weight(self.qw_r, self.qw_i),
                                    _pack_bias(self.qb_r, self.qb_i))
            self.k_wp, self.k_bp = (_pack_weight(self.kw_r, self.kw_i),
                                    _pack_bias(self.kb_r, self.kb_i))
            self.v_wp, self.v_bp = (_pack_weight(self.vw_r, self.vw_i),
                                    _pack_bias(self.vb_r, self.vb_i))

        self.ow_r = xavier(ks[12], E_q, E_total)
        self.ow_i = xavier(ks[13], E_q, E_total)
        if bias:
            self.ob_r = xavier(ks[14], 1, E_q)[0]
            self.ob_i = xavier(ks[15], 1, E_q)[0]
        else:
            self.ob_r = jnp.zeros((E_q,), jnp.float32)
            self.ob_i = jnp.zeros((E_q,), jnp.float32)
        self.out_wp, self.out_bp = (_pack_weight(self.ow_r, self.ow_i),
                                    _pack_bias(self.ob_r, self.ob_i))

    def __call__(self, query, key, value, attn_mask=None, is_causal=False):
        # TODO(synk): explicit attn_mask tensor and dropout_p > 0 are not
        # implemented (the inference path with attn_mask=None, dropout=0).
        assert attn_mask is None
        H, Dh, E = self.nheads, self.E_head, self.E_total

        qr, qi = _split_complex(query)
        kr, ki = _split_complex(key)
        vr, vi = _split_complex(value)

        if self._qkv_same_embed_dim and (query is key) and (key is value):
            rr, ri = packed_complex_linear(qr, qi, self.packed_wp, self.packed_bp)
            q_r, k_r, v_r = rr[..., :E], rr[..., E:2 * E], rr[..., 2 * E:]
            q_i, k_i, v_i = ri[..., :E], ri[..., E:2 * E], ri[..., 2 * E:]
        else:
            q_r, q_i = packed_complex_linear(qr, qi, self.q_wp, self.q_bp)
            k_r, k_i = packed_complex_linear(kr, ki, self.k_wp, self.k_bp)
            v_r, v_i = packed_complex_linear(vr, vi, self.v_wp, self.v_bp)

        def split_heads(x):
            b, l, _ = x.shape
            return x.reshape(b, l, H, Dh).transpose(0, 2, 1, 3)

        # TODO(synk): head-merged I/O layouts would delete these two transposes,
        # but require 2*E_head to be a multiple of 128 for lane-aligned blocks.
        o_r, o_i = complex_sdpa(split_heads(q_r), split_heads(q_i),
                                split_heads(k_r), split_heads(k_i),
                                split_heads(v_r), split_heads(v_i),
                                is_causal=is_causal)

        def merge_heads(x):
            b, _, l, _ = x.shape
            return x.transpose(0, 2, 1, 3).reshape(b, l, H * Dh)

        y_r, y_i = packed_complex_linear(merge_heads(o_r), merge_heads(o_i),
                                         self.out_wp, self.out_bp,
                                         out_dtype=jnp.float32)
        return lax.complex(y_r, y_i)


# ----------------------------------------------------------------------------
# Pure-JAX complex64 reference (correctness check only)
# ----------------------------------------------------------------------------
def ref_cmha(m, query, key, value, attn_mask=None, is_causal=False):
    assert attn_mask is None

    def to_c(x):
        if jnp.iscomplexobj(x):
            return x.astype(jnp.complex64)
        return lax.complex(x.astype(jnp.float32), jnp.zeros_like(x, jnp.float32))

    def clinear(x, wr, wi, br, bi):
        w = (wr + 1j * wi).astype(jnp.complex64)
        b = (br + 1j * bi).astype(jnp.complex64)
        return x @ w.T + b

    q, k, v = to_c(query), to_c(key), to_c(value)
    if m._qkv_same_embed_dim:
        qw_r, kw_r, vw_r = jnp.split(m.pw_r, 3, axis=0)
        qw_i, kw_i, vw_i = jnp.split(m.pw_i, 3, axis=0)
        qb_r, kb_r, vb_r = jnp.split(m.pb_r, 3)
        qb_i, kb_i, vb_i = jnp.split(m.pb_i, 3)
        q = clinear(q, qw_r, qw_i, qb_r, qb_i)
        k = clinear(k, kw_r, kw_i, kb_r, kb_i)
        v = clinear(v, vw_r, vw_i, vb_r, vb_i)
    else:
        q = clinear(q, m.qw_r, m.qw_i, m.qb_r, m.qb_i)
        k = clinear(k, m.kw_r, m.kw_i, m.kb_r, m.kb_i)
        v = clinear(v, m.vw_r, m.vw_i, m.vb_r, m.vb_i)

    H, Dh = m.nheads, m.E_head

    def sh(x):
        b, l, _ = x.shape
        return x.reshape(b, l, H, Dh).transpose(0, 2, 1, 3)

    q, k, v = sh(q), sh(k), sh(v)
    s = jnp.einsum("bhld,bhmd->bhlm", q, k) / math.sqrt(Dh)
    if is_causal:
        lq, lk = s.shape[-2], s.shape[-1]
        mask = jnp.tril(jnp.ones((lq, lk), dtype=bool))
        s = jnp.where(mask, s, jnp.complex64(-1e30 - 1e30j))
    p = lax.complex(jax.nn.softmax(jnp.real(s), axis=-1),
                    jax.nn.softmax(jnp.imag(s), axis=-1))
    o = jnp.einsum("bhlm,bhmd->bhld", p, v)
    o = o.transpose(0, 2, 1, 3).reshape(o.shape[0], -1, H * Dh)
    return clinear(o, m.ow_r, m.ow_i, m.ob_r, m.ob_i)


if __name__ == "__main__":
    root = jax.random.PRNGKey(0)
    k_mod, k_xr, k_xi = jax.random.split(root, 3)

    B, L, E, nheads = 2, 8, 32, 4
    mha = CMultiHeadAttention(E, E, E, E, nheads, dropout=0.0, bias=True, key=k_mod)

    xr = jax.random.normal(k_xr, (B, L, E), dtype=jnp.float32)
    xi = jax.random.normal(k_xi, (B, L, E), dtype=jnp.float32)
    x = lax.complex(xr, xi)            # (N, L_q, E_q) complex64, self-attention

    def max_rel_err(a, b):
        return float(jnp.max(jnp.abs(a - b)) / jnp.max(jnp.abs(b)))

    out = jax.block_until_ready(mha(x, x, x))
    ref = jax.block_until_ready(ref_cmha(mha, x, x, x))
    assert out.shape == ref.shape == (B, L, E)
    assert out.dtype == jnp.complex64
    assert max_rel_err(out, ref) < 3e-2

    out_c = jax.block_until_ready(mha(x, x, x, is_causal=True))
    ref_c = jax.block_until_ready(ref_cmha(mha, x, x, x, is_causal=True))
    assert max_rel_err(out_c, ref_c) < 3e-2

    print("KERNEL_OK")
</pallas_src>

<mosaic_0001>
module attributes {stable_mosaic.version = 11 : i64} {
  func.func @_packed_linear_kernel(%arg0: i32, %arg1: i32, %arg2: i32, %arg3: memref<16x64xbf16, #tpu.memory_space<vmem>>, %arg4: memref<64x192xbf16, #tpu.memory_space<vmem>>, %arg5: memref<1x192xf32, #tpu.memory_space<vmem>>, %arg6: memref<16x192xbf16, #tpu.memory_space<vmem>>, %arg7: memref<16x192xf32, #tpu.memory_space<vmem>>) attributes {dimension_semantics = [#tpu.dimension_semantics<parallel>, #tpu.dimension_semantics<parallel>, #tpu.dimension_semantics<arbitrary>], iteration_bounds = array<i64: 1, 1, 1>, scalar_prefetch = 0 : i64, scratch_operands = 1 : i64, tpu.core_type = #tpu.core_type<tc>, window_params = [{transform_indices = @transform_0, window_bounds = array<i64: 16, 64>}, {transform_indices = @transform_1, window_bounds = array<i64: 64, 192>}, {transform_indices = @transform_2, window_bounds = array<i64: 1, 192>}, {transform_indices = @transform_3, window_bounds = array<i64: 16, 192>}]} {
    %c0_i32 = arith.constant 0 : i32
    %0 = arith.cmpi eq, %arg2, %c0_i32 : i32
    %1 = arith.extui %0 : i1 to i32
    %c0_i32_0 = arith.constant 0 : i32
    %2 = arith.cmpi ne, %1, %c0_i32_0 : i32
    scf.if %2 {
      %c0_10 = arith.constant 0 : index
      %c0_11 = arith.constant 0 : index
      %12 = vector.load %arg5[%c0_10, %c0_11] : memref<1x192xf32, #tpu.memory_space<vmem>>, vector<1x192xf32>
      %13 = vector.shape_cast %12 : vector<1x192xf32> to vector<1x192xf32>
      %14 = vector.broadcast %13 : vector<1x192xf32> to vector<16x192xf32>
      %c0_12 = arith.constant 0 : index
      %c0_13 = arith.constant 0 : index
      %15 = vector.load %arg7[%c0_12, %c0_13] : memref<16x192xf32, #tpu.memory_space<vmem>>, vector<16x192xf32>
      tpu.vector_store %arg7[%c0_12, %c0_13], %14 {strides = array<i32>} : memref<16x192xf32, #tpu.memory_space<vmem>>, vector<16x192xf32>,
    } else {
    }
    %c0 = arith.constant 0 : index
    %c0_1 = arith.constant 0 : index
    %3 = vector.load %arg7[%c0, %c0_1] : memref<16x192xf32, #tpu.memory_space<vmem>>, vector<16x192xf32>
    %c0_2 = arith.constant 0 : index
    %c0_3 = arith.constant 0 : index
    %4 = vector.load %arg3[%c0_2, %c0_3] : memref<16x64xbf16, #tpu.memory_space<vmem>>, vector<16x64xbf16>
    %c0_4 = arith.constant 0 : index
    %c0_5 = arith.constant 0 : index
    %5 = vector.load %arg4[%c0_4, %c0_5] : memref<64x192xbf16, #tpu.memory_space<vmem>>, vector<64x192xbf16>
    %cst = arith.constant dense<0.000000e+00> : vector<16x192xf32>
    %6 = tpu.matmul %4, %5, %cst {dimension_numbers = #tpu.dot_dimension_numbers<[1], [0], [0], [1], [0, 0, 1, 1], [], []>} : vector<16x64xbf16>, vector<64x192xbf16>, vector<16x192xf32> -> vector<16x192xf32>
    %7 = arith.addf %3, %6 : vector<16x192xf32>
    %c0_6 = arith.constant 0 : index
    %c0_7 = arith.constant 0 : index
    %8 = vector.load %arg7[%c0_6, %c0_7] : memref<16x192xf32, #tpu.memory_space<vmem>>, vector<16x192xf32>
    tpu.vector_store %arg7[%c0_6, %c0_7], %7 {strides = array<i32>} : memref<16x192xf32, #tpu.memory_space<vmem>>, vector<16x192xf32>,
    %c0_i32_8 = arith.constant 0 : i32
    %9 = arith.cmpi eq, %arg2, %c0_i32_8 : i32
    %10 = arith.extui %9 : i1 to i32
    %c0_i32_9 = arith.constant 0 : i32
    %11 = arith.cmpi ne, %10, %c0_i32_9 : i32
    scf.if %11 {
      %c0_10 = arith.constant 0 : index
      %c0_11 = arith.constant 0 : index
      %12 = vector.load %arg7[%c0_10, %c0_11] : memref<16x192xf32, #tpu.memory_space<vmem>>, vector<16x192xf32>
      %13 = arith.truncf %12 : vector<16x192xf32> to vector<16x192xbf16>
      %c0_12 = arith.constant 0 : index
      %c0_13 = arith.constant 0 : index
      %14 = vector.load %arg6[%c0_12, %c0_13] : memref<16x192xbf16, #tpu.memory_space<vmem>>, vector<16x192xbf16>
      tpu.vector_store %arg6[%c0_12, %c0_13], %13 {strides = array<i32>} : memref<16x192xbf16, #tpu.memory_space<vmem>>, vector<16x192xbf16>,
    } else {
    }
    return
  }
  func.func @transform_0(%arg0: i32, %arg1: i32, %arg2: i32) -> (i32, i32) {
    %c0_i32 = arith.constant 0 : i32
    return %arg0, %arg2 : i32, i32
  }
  func.func @transform_1(%arg0: i32, %arg1: i32, %arg2: i32) -> (i32, i32) {
    %c0_i32 = arith.constant 0 : i32
    return %arg2, %arg1 : i32, i32
  }
  func.func @transform_2(%arg0: i32, %arg1: i32, %arg2: i32) -> (i32, i32) {
    %c0_i32 = arith.constant 0 : i32
    %c0_i32_0 = arith.constant 0 : i32
    return %c0_i32, %arg1 : i32, i32
  }
  func.func @transform_3(%arg0: i32, %arg1: i32, %arg2: i32) -> (i32, i32) {
    %c0_i32 = arith.constant 0 : i32
    return %arg0, %arg1 : i32, i32
  }
}

</mosaic_0001>

<llo_original>
// kernel: tpu_custom_call.1
$region0: #{tpu_custom_call.1}
  #allocation0 [shape = 'u32[]', space=smem, size = 0x4, offset = 0x4, fixed_abs, tag = 'smem constant byte address 0x4 - core index']
  #allocation1 [shape = 'u32[144,128]{1,0:T(1,128)}', space=vmem, size = 0x12000, scoped, tag = 'internal scratch']
  #allocation2 [shape = 'f32[16,192]{1,0:T(8,128)}', space=vmem, size = 0x4000, scoped, tag = 'scratch operand']
  %s0 = inlined_call_operand.hbm [shape: bf16[16,64], index: 0, kind: input, shape index: {}]
  %s1 = inlined_call_operand.hbm [shape: bf16[64,192], index: 1, kind: input, shape index: {}]
  %s2 = inlined_call_operand.vmem [shape: f32[1,192], index: 2, kind: input, shape index: {}]
  %s3 = inlined_call_operand.hbm [shape: bf16[16,192], index: 3, kind: output, shape index: {}]
  %s4 = sld [smem:[#allocation0]]
  $region38: #{tpu_custom_call.1} parent=0
    _
  %s6 = ssub.s32 1, %s4
  %s7 = scalar_select 0, %s6, %s4
  $region1: #{tpu_custom_call.1} parent=0
    #allocation3 [shape = 'u8[4096]{0}', space=vmem, size = 0x1000, scoped, tag = 'input window, operand 0, single buffered']
    #allocation4 [shape = 's32[1]{0}', space=sflag, size = 0x4, scoped, tag = 'scoped memory for tpu_custom_call.1']
    #allocation5 [shape = 's32[1]{0}', space=sflag, size = 0x4, scoped, tag = 'scoped memory for tpu_custom_call.1']
    #allocation6 [shape = 'u8[32768]{0}', space=vmem, size = 0x8000, scoped, tag = 'input window, operand 1, single buffered']
    #allocation7 [shape = 's32[1]{0}', space=sflag, size = 0x4, scoped, tag = 'scoped memory for tpu_custom_call.1']
    #allocation8 [shape = 'u8[8192]{0}', space=vmem, size = 0x2000, scoped, tag = 'output window, operand 0, single buffered']
    %8 = vsyncpa [#allocation4], 0
    %9 = vsyncpa [#allocation7], 0
    %10 = vsyncpa [#allocation5], 0
    // Predicated region
    $region2: #{tpu_custom_call.1} parent=1 // pred_check
      _
    $region3: #{tpu_custom_call.1} parent=1 // pred_check_branch
      %12 = sbr.rel (0) target = $region5
    $region4: #{tpu_custom_call.1} parent=1 // pred_region
      %s14 = ssub.s32 128, 128
      %15 = vsyncadd [#allocation4], %s14
      %s16 = sshll.u32 [#allocation3], 4
      %s17 = int_to_ptr.vmem [resolvable:$true] %s16
      %22 = dma.hbm_to_vmem [thread:$0]  %s0, 128, %s17, [#allocation4], 64, 64, 4
    $region5: #{tpu_custom_call.1} parent=1 // pred_fallthru
      _
    // Predicated region
    $region6: #{tpu_custom_call.1} parent=1 // pred_check
      _
    $region7: #{tpu_custom_call.1} parent=1 // pred_check_branch
      %24 = sbr.rel (0) target = $region9
    $region8: #{tpu_custom_call.1} parent=1 // pred_region
      %s26 = ssub.s32 1024, 1024
      %27 = vsyncadd [#allocation7], %s26
      %s28 = sshll.u32 [#allocation6], 4
      %s29 = int_to_ptr.vmem [resolvable:$true] %s28
      %34 = dma.hbm_to_vmem [thread:$0]  %s1, 1024, %s29, [#allocation7], 128, 128, 8
    $region9: #{tpu_custom_call.1} parent=1 // pred_fallthru
      _
    // Predicated region
    $region10: #{tpu_custom_call.1} parent=1 // pred_check
      _
    $region11: #{tpu_custom_call.1} parent=1 // pred_check_branch
      %36 = sbr.rel (0) target = $region13
    $region12: #{tpu_custom_call.1} parent=1 // pred_region
      _
    $region13: #{tpu_custom_call.1} parent=1 // pred_fallthru
      _
    // Predicated region
    $region14: #{tpu_custom_call.1} parent=1 // pred_check
      _
    $region15: #{tpu_custom_call.1} parent=1 // pred_check_branch
      %38 = sbr.rel (0) target = $region17
    $region16: #{tpu_custom_call.1} parent=1 // pred_region
      %39 = dma.done [#allocation4], 128
    $region17: #{tpu_custom_call.1} parent=1 // pred_fallthru
      _
    // Predicated region
    $region18: #{tpu_custom_call.1} parent=1 // pred_check
      _
    $region19: #{tpu_custom_call.1} parent=1 // pred_check_branch
      %41 = sbr.rel (0) target = $region21
    $region20: #{tpu_custom_call.1} parent=1 // pred_region
      %42 = dma.done [#allocation7], 1024
    $region21: #{tpu_custom_call.1} parent=1 // pred_fallthru
      _
    %p44 = scmp.eq.s32.totalorder 0, 0
    // Predicated region
    $region22: #{tpu_custom_call.1} parent=1 // pred_check
      %p45 = pneg %p44
    $region23: #{tpu_custom_call.1} parent=1 // pred_check_branch
      %47 = sbr.rel (%p45) target = $region25
    $region24: #{tpu_custom_call.1} parent=1 // pred_region
      %v48 = vld [vmem:[%s2] sm:$0x3]
      %v50 = vlaneseq
      %v51 = vshrl.u32 %v50, 7
      %v52 = vsub.s32 0, %v51
      %v53 = vrot.slane %v48, %v52
      %v54 = vlaneseq
      %v55 = vshrl.u32 %v54, 7
      %v56 = vsub.s32 1, %v55
      %v57 = vrot.slane %v48, %v56
      %60 = vst [vmem:[#allocation2] sm:$0xff] %v53
      %vm61 = vcmask 523264
      %62 = vst.msk [vmem:[#allocation2 + $0x8] sm:$0xff] %vm61, %v57
      %63 = vst [vmem:[#allocation2 + $0x10] sm:$0xff] %v53
      %64 = vst.msk [vmem:[#allocation2 + $0x18] sm:$0xff] %vm61, %v57
    $region25: #{tpu_custom_call.1} parent=1 // pred_fallthru
      _
    %v65 = vld [vmem:[#allocation2] sm:$0xff]
    %v66 = vld [vmem:[#allocation2 + $0x8] sm:$0xff]
    %v67 = vld [vmem:[#allocation2 + $0x10] sm:$0xff]
    %v68 = vld [vmem:[#allocation2 + $0x18] sm:$0xff]
    %v69 = vld [vmem:[#allocation3] sm:$0xf]
    %v70 = vld [vmem:[#allocation3 + $0x4] sm:$0xf]
    %v71 = vld [vmem:[#allocation6] sm:$0xff]
    %v72 = vld [vmem:[#allocation6 + $0x8] sm:$0xff]
    %v73 = vld [vmem:[#allocation6 + $0x10] sm:$0xff]
    %v74 = vld [vmem:[#allocation6 + $0x18] sm:$0xff]
    %v75 = vld [vmem:[#allocation6 + $0x20] sm:$0xff]
    %v76 = vld [vmem:[#allocation6 + $0x28] sm:$0xff]
    %v77 = vld [vmem:[#allocation6 + $0x30] sm:$0xff]
    %v78 = vld [vmem:[#allocation6 + $0x38] sm:$0xff]
    %v81 = vunpack.c.l.b16 %v69
    %v82 = vunpack.c.l.b16 %v70
    %v83 = vpack.c.b16 %v82, %v81
    %v92 = vunpack.c.l.b16 %v71
    %v93 = vunpack.c.h.b16 %v71
    %v94 = vunpack.c.l.b16 %v72
    %v95 = vunpack.c.h.b16 %v72
    %v96 = vunpack.c.l.b16 %v73
    %v97 = vunpack.c.h.b16 %v73
    %v98 = vunpack.c.l.b16 %v74
    %v99 = vunpack.c.h.b16 %v74
    %v100 = vunpack.c.l.b16 %v75
    %v101 = vunpack.c.h.b16 %v75
    %v102 = vunpack.c.l.b16 %v76
    %v103 = vunpack.c.h.b16 %v76
    %v104 = vunpack.c.l.b16 %v77
    %v105 = vunpack.c.h.b16 %v77
    %v106 = vunpack.c.l.b16 %v78
    %v107 = vunpack.c.h.b16 %v78
    %v108 = vpack.c.b16 %v94, %v92
    %v109 = vpack.c.b16 %v95, %v93
    %v110 = vpack.c.b16 %v98, %v96
    %v111 = vpack.c.b16 %v99, %v97
    %v112 = vpack.c.b16 %v102, %v100
    %v113 = vpack.c.b16 %v103, %v101
    %v114 = vpack.c.b16 %v106, %v104
    %v115 = vpack.c.b16 %v107, %v105
    %vm124 = vcmask 523264
    %v126 = vsel %vm124, %v83, 0
    %128 = vmatprep.subr.bf16.mxu0 %v109
    %129 = vmatpush1.bf16.msra.mxu0 %v108
    %130 = vmatprep.subr.bf16.mxu0 %v111
    %131 = vmatpush1.bf16.msra.mxu0 %v110
    %132 = vmatprep.subr.bf16.mxu0 %v113
    %133 = vmatpush1.bf16.msra.mxu0 %v112
    %134 = vmatprep.subr.bf16.mxu0 %v115
    %135 = vmatpush1.bf16.msra.mxu0 %v114
    %136 = vmatprep.subr.bf16.mxu0 0
    %137 = vmatpush1.bf16.msra.mxu0 0
    %138 = vmatprep.subr.bf16.mxu0 0
    %139 = vmatpush1.bf16.msra.mxu0 0
    %140 = vmatprep.subr.bf16.mxu0 0
    %141 = vmatpush1.bf16.msra.mxu0 0
    %142 = vmatprep.subr.bf16.mxu0 0
    %143 = vmatpush1.bf16.msra.mxu0 0
    %144 = vmatprep.subr.bf16.mxu0 0
    %145 = vmatpush1.bf16.msra.mxu0 0
    %146 = vmatprep.subr.bf16.mxu0 0
    %147 = vmatpush1.bf16.msra.mxu0 0
    %148 = vmatprep.subr.bf16.mxu0 0
    %149 = vmatpush1.bf16.msra.mxu0 0
    %150 = vmatprep.subr.bf16.mxu0 0
    %151 = vmatpush1.bf16.msra.mxu0 0
    %152 = vmatprep.subr.bf16.mxu0 0
    %153 = vmatpush1.bf16.msra.mxu0 0
    %154 = vmatprep.subr.bf16.mxu0 0
    %155 = vmatpush1.bf16.msra.mxu0 0
    %156 = vmatprep.subr.bf16.mxu0 0
    %157 = vmatpush1.bf16.msra.mxu0 0
    %158 = vmatprep.subr.bf16.mxu0 0
    %159 = vmatpush1.bf16.msra.mxu0 0
    %160 = vmatprep.mubr.bf16.mxu0 0
    %161 = vmatmul.mubr.bf16.gmra.mrb[0].mxu0 %v126
    %v162 = vpop.f32.mrb[0].mxu0
    %v163 = vadd.f32 0.0, %v162
    %v164 = vpop.f32.mrb[0].mxu0
    %v165 = vadd.f32 0.0, %v164
    %v166 = vpop.f32.mrb[0].mxu0
    %v167 = vadd.f32 0.0, %v166
    %v168 = vpop.f32.mrb[0].mxu0
    %v169 = vadd.f32 0.0, %v168
    %170 = vdwg.mxu0
    %v171 = vadd.f32 %v65, %v163
    %v172 = vadd.f32 %v66, %v165
    %v173 = vadd.f32 %v67, %v167
    %v174 = vadd.f32 %v68, %v169
    %175 = vst [vmem:[#allocation2] sm:$0xff] %v171
    %176 = vst.msk [vmem:[#allocation2 + $0x8] sm:$0xff] %vm124, %v172
    %177 = vst [vmem:[#allocation2 + $0x10] sm:$0xff] %v173
    %178 = vst.msk [vmem:[#allocation2 + $0x18] sm:$0xff] %vm124, %v174
    // Predicated region
    $region26: #{tpu_custom_call.1} parent=1 // pred_check
      %p179 = pneg %p44
    $region27: #{tpu_custom_call.1} parent=1 // pred_check_branch
      %181 = sbr.rel (%p179) target = $region29
    $region28: #{tpu_custom_call.1} parent=1 // pred_region
      %v182 = vld [vmem:[#allocation2] sm:$0xff]
      %v183 = vld [vmem:[#allocation2 + $0x8] sm:$0xff]
      %v184 = vld [vmem:[#allocation2 + $0x10] sm:$0xff]
      %v185 = vld [vmem:[#allocation2 + $0x18] sm:$0xff]
      %v186 = vpack.c.bf16 %v184, %v182
      %v187 = vpack.c.bf16 %v185, %v183
      %v190 = vunpack.c.l.b16 %v186
      %v191 = vunpack.c.l.b16 %v187
      %v192 = vunpack.c.h.b16 %v186
      %v193 = vunpack.c.h.b16 %v187
      %v194 = vpack.c.b16 %v191, %v190
      %v195 = vpack.c.b16 %v193, %v192
      %vm198 = vcmask 1043456
      %vm199 = vcmask 523268
      %vm200 = vmor %vm199, %vm198
      %201 = vst.msk [vmem:[#allocation8] sm:$0xff] %vm200, %v194
      %202 = vst.msk [vmem:[#allocation8 + $0x8] sm:$0xff] %vm200, %v195
    $region29: #{tpu_custom_call.1} parent=1 // pred_fallthru
      _
    // Predicated region
    $region30: #{tpu_custom_call.1} parent=1 // pred_check
      _
    $region31: #{tpu_custom_call.1} parent=1 // pred_check_branch
      %204 = sbr.rel (0) target = $region33
    $region32: #{tpu_custom_call.1} parent=1 // pred_region
      %s206 = ssub.s32 256, 256
      %207 = vsyncadd [#allocation5], %s206
      %s208 = sshll.u32 [#allocation8], 4
      %s209 = int_to_ptr.vmem [resolvable:$true] %s208
      %214 = dma.vmem_to_hbm [thread:$0]  %s209, 256, %s3, [#allocation5], 128, 128, 8
    $region33: #{tpu_custom_call.1} parent=1 // pred_fallthru
      _
    // Predicated region
    $region34: #{tpu_custom_call.1} parent=1 // pred_check
      _
    $region35: #{tpu_custom_call.1} parent=1 // pred_check_branch
      %216 = sbr.rel (0) target = $region37
    $region36: #{tpu_custom_call.1} parent=1 // pred_region
      %217 = dma.done [#allocation5], 256
    $region37: #{tpu_custom_call.1} parent=1 // pred_fallthru
      _
    %218 = vsyncpa [#allocation4], 1
    %219 = vsyncpa [#allocation7], 1
    %220 = vsyncpa [#allocation5], 1

</llo_original>
